<compile_context>
chip_gen: v5e
topology: v5e:2x2
jax: 0.10.0
libtpu: 0.0.40
codegen_flags: <defaults>
</compile_context>

<pallas_src>
import math

import numpy as np
import jax
import jax.numpy as jnp
from jax import lax
from jax.experimental import pallas as pl
from jax.experimental.pallas import tpu as pltpu

BN_EPS = 1e-5
LEAKY_SLOPE = 0.01      # nn.LeakyReLU() default
PRELU_INIT = 0.25       # nn.PReLU default init
ROW_TILE = 512          # rows (B*H*W) per grid step


# -----------------------------------------------------------------------------
# Pallas kernels: fused  act( X @ W + b (+ residual) )
#   act(v) = where(v > 0, v, alpha * v)
#   alpha = 1 -> identity, alpha = 0.01 -> LeakyReLU, alpha = vector -> PReLU
# -----------------------------------------------------------------------------
def _mm_bias_act_kernel(x_ref, w_ref, b_ref, a_ref, o_ref):
    y = jnp.dot(x_ref[...], w_ref[...], preferred_element_type=jnp.float32)
    y = y + b_ref[...]
    o_ref[...] = jnp.where(y > 0, y, a_ref[...] * y)


def _mm_bias_act_res_kernel(x_ref, w_ref, b_ref, a_ref, r_ref, o_ref):
    y = jnp.dot(x_ref[...], w_ref[...], preferred_element_type=jnp.float32)
    y = y + b_ref[...] + r_ref[...]
    o_ref[...] = jnp.where(y > 0, y, a_ref[...] * y)


def _row_tile(m):
    tm = min(ROW_TILE, m)
    return tm if m % tm == 0 else m     # keep blocks exactly dividing M


def _specs(m, k, n, tm, with_res):
    grid = (pl.cdiv(m, tm),)
    in_specs = [
        pl.BlockSpec((tm, k), lambda i: (i, 0)),     # X row tile
        pl.BlockSpec((k, n), lambda i: (0, 0)),      # W  (grid-invariant)
        pl.BlockSpec((1, n), lambda i: (0, 0)),      # bias
        pl.BlockSpec((1, n), lambda i: (0, 0)),      # activation alpha
    ]
    if with_res:
        in_specs.append(pl.BlockSpec((tm, n), lambda i: (i, 0)))
    out_spec = pl.BlockSpec((tm, n), lambda i: (i, 0))
    return grid, in_specs, out_spec


@jax.jit
def _fused_mm(x, w, b2, a2):
    m, k = x.shape
    n = w.shape[1]
    tm = _row_tile(m)
    grid, in_specs, out_spec = _specs(m, k, n, tm, with_res=False)
    return pl.pallas_call(
        _mm_bias_act_kernel,
        out_shape=jax.ShapeDtypeStruct((m, n), jnp.float32),
        grid=grid, in_specs=in_specs, out_specs=out_spec,
        compiler_params=pltpu.CompilerParams(dimension_semantics=("parallel",)),
    )(x, w, b2, a2)


@jax.jit
def _fused_mm_res(x, w, b2, a2, r):
    m, k = x.shape
    n = w.shape[1]
    tm = _row_tile(m)
    grid, in_specs, out_spec = _specs(m, k, n, tm, with_res=True)
    return pl.pallas_call(
        _mm_bias_act_res_kernel,
        out_shape=jax.ShapeDtypeStruct((m, n), jnp.float32),
        grid=grid, in_specs=in_specs, out_specs=out_spec,
        compiler_params=pltpu.CompilerParams(dimension_semantics=("parallel",)),
    )(x, w, b2, a2, r)


def fused_matmul(x, w, bias=None, act_alpha=None, residual=None):
    """act(x @ w + bias (+ residual)) through the Pallas kernels above."""
    x = jnp.asarray(x, jnp.float32)
    w = jnp.asarray(w, jnp.float32)
    n = w.shape[1]
    b2 = (jnp.zeros((1, n), jnp.float32) if bias is None
          else jnp.asarray(bias, jnp.float32).reshape(1, n))
    if act_alpha is None:
        a2 = jnp.ones((1, n), jnp.float32)
    else:
        a2 = jnp.broadcast_to(
            jnp.asarray(act_alpha, jnp.float32).reshape(-1), (n,)).reshape(1, n)
    if residual is None:
        return _fused_mm(x, w, b2, a2)
    return _fused_mm_res(x, w, b2, a2, jnp.asarray(residual, jnp.float32))


# -----------------------------------------------------------------------------
# Wrapper-side data prep (im2col / layout) and the two op backends
# -----------------------------------------------------------------------------
def _im2col(x, ksize, stride, pad):
    """(B,H,W,C) -> zero-padded patches (B,Ho,Wo,ksize*ksize*C)."""
    b, h, w, c = x.shape
    if pad:
        x = jnp.pad(x, ((0, 0), (pad, pad), (pad, pad), (0, 0)))
    ho = (h + 2 * pad - ksize) // stride + 1
    wo = (w + 2 * pad - ksize) // stride + 1
    cols = []
    for dy in range(ksize):
        for dx in range(ksize):
            cols.append(lax.slice(
                x, (0, dy, dx, 0),
                (b, dy + stride * (ho - 1) + 1, dx + stride * (wo - 1) + 1, c),
                (1, stride, stride, 1)))
    return jnp.concatenate(cols, axis=-1), ho, wo


def _conv_w_to_mat(w):
    """PyTorch Conv2d weight (Cout,Cin,kh,kw) -> (kh*kw*Cin, Cout), im2col order."""
    cout, cin, kh, kw = w.shape
    return jnp.transpose(w, (2, 3, 1, 0)).reshape(kh * kw * cin, cout)


def conv_pallas(x, w, b, stride, pad, act_alpha=None, residual=None):
    bsz = x.shape[0]
    cout, cin, kh, kw = w.shape
    patches, ho, wo = _im2col(x, kh, stride, pad)
    x2 = patches.reshape(bsz * ho * wo, kh * kw * cin)
    r2 = None if residual is None else jnp.reshape(residual, (bsz * ho * wo, cout))
    y2 = fused_matmul(x2, _conv_w_to_mat(w), b, act_alpha, r2)
    return y2.reshape(bsz, ho, wo, cout)


def linear_pallas(x, w_mat, b, act_alpha=None):
    return fused_matmul(x, w_mat, b, act_alpha)


def _interp_matrix(dst, src):
    """1-D bilinear interpolation matrix, align_corners=True (F.interpolate)."""
    m = np.zeros((dst, src), np.float32)
    if src == 1 or dst == 1:
        m[:, 0] = 1.0
        return m
    for i in range(dst):
        p = i * (src - 1) / (dst - 1)
        lo = int(np.floor(p))
        hi = min(lo + 1, src - 1)
        f = p - lo
        m[i, lo] += 1.0 - f
        m[i, hi] += f
    return m


def upsample_add_pallas(x, y):
    """_upsample_add: bilinear(align_corners=True) upsample of x to y's size, + y."""
    b, h, w, c = x.shape
    _, hh, ww, _ = y.shape
    m_up = np.kron(_interp_matrix(hh, h), _interp_matrix(ww, w))   # (hh*ww, h*w)
    x_bc = jnp.transpose(x, (0, 3, 1, 2)).reshape(b * c, h * w)
    y_bc = jnp.transpose(y, (0, 3, 1, 2)).reshape(b * c, hh * ww)
    o_bc = fused_matmul(x_bc, jnp.asarray(m_up.T), None, None, residual=y_bc)
    return jnp.transpose(o_bc.reshape(b, c, hh, ww), (0, 2, 3, 1))


PALLAS_OPS = dict(conv=conv_pallas, linear=linear_pallas,
                  upsample_add=upsample_add_pallas)


# ---- pure-JAX reference backend (lax.conv etc.) for validation ---------------
def conv_ref(x, w, b, stride, pad, act_alpha=None, residual=None):
    out = lax.conv_general_dilated(
        jnp.asarray(x, jnp.float32),
        jnp.transpose(jnp.asarray(w, jnp.float32), (2, 3, 1, 0)),
        window_strides=(stride, stride),
        padding=((pad, pad), (pad, pad)),
        dimension_numbers=("NHWC", "HWIO", "NHWC"),
        precision=lax.Precision.HIGHEST)
    if b is not None:
        out = out + jnp.asarray(b, jnp.float32).reshape(1, 1, 1, -1)
    if residual is not None:
        out = out + residual
    if act_alpha is not None:
        a = jnp.broadcast_to(jnp.asarray(act_alpha, jnp.float32).reshape(-1),
                             (out.shape[-1],)).reshape(1, 1, 1, -1)
        out = jnp.where(out > 0, out, a * out)
    return out


def linear_ref(x, w_mat, b, act_alpha=None):
    y = jnp.dot(jnp.asarray(x, jnp.float32), jnp.asarray(w_mat, jnp.float32),
                precision=lax.Precision.HIGHEST)
    if b is not None:
        y = y + jnp.asarray(b, jnp.float32).reshape(1, -1)
    if act_alpha is not None:
        a = jnp.broadcast_to(jnp.asarray(act_alpha, jnp.float32).reshape(-1),
                             (y.shape[-1],)).reshape(1, -1)
        y = jnp.where(y > 0, y, a * y)
    return y


def upsample_add_ref(x, y):
    b, h, w, c = x.shape
    _, hh, ww, _ = y.shape
    a_mat = jnp.asarray(_interp_matrix(hh, h))
    b_mat = jnp.asarray(_interp_matrix(ww, w))
    t = jnp.einsum("Hh,bhwc->bHwc", a_mat, x, precision=lax.Precision.HIGHEST)
    u = jnp.einsum("Ww,bHwc->bHWc", b_mat, t, precision=lax.Precision.HIGHEST)
    return u + y


REF_OPS = dict(conv=conv_ref, linear=linear_ref, upsample_add=upsample_add_ref)


# -----------------------------------------------------------------------------
# GradualStyleEncoder (num_layers=50, mode='ir') — channel widths scaled down so
# the self-test runs at small shapes; the block structure / capture indices /
# forward control flow match the spec exactly.
# -----------------------------------------------------------------------------
CFG = dict(
    in_ch=3,
    input_size=32,                        # original uses 256 (c3 is input/16)
    stem_ch=16,                           # original 64
    # IR-50 body: (in_channel, depth, num_units); first unit of each block has
    # stride 2, the rest stride 1.  Original depths 64/128/256/512.
    blocks=[(16, 16, 3), (16, 24, 4), (24, 32, 14), (32, 48, 3)],
    style_dim=48,                         # original 512
    stylegan_size=64,                     # style_count = 2*log2(64) - 2 = 10
    coarse_ind=3,
    middle_ind=7,
    c1_idx=6, c2_idx=20, c3_idx=23,       # capture points in the body (as in spec)
)


def _conv_weight(key, cout, cin, k):
    return jax.random.normal(key, (cout, cin, k, k), jnp.float32) / np.sqrt(cin * k * k)


def _bn_params(key, c):
    k1, k2, k3, k4 = jax.random.split(key, 4)
    return dict(gamma=1.0 + 0.1 * jax.random.normal(k1, (c,), jnp.float32),
                beta=0.1 * jax.random.normal(k2, (c,), jnp.float32),
                mean=0.1 * jax.random.normal(k3, (c,), jnp.float32),
                var=jnp.abs(1.0 + 0.1 * jax.random.normal(k4, (c,), jnp.float32)))


def make_params(key, cfg):
    keys = iter(jax.random.split(key, 1024))
    nk = lambda: next(keys)
    p = {}
    stem = cfg["stem_ch"]
    p["stem_conv"] = _conv_weight(nk(), stem, cfg["in_ch"], 3)       # bias=False
    p["stem_bn"] = _bn_params(nk(), stem)
    p["stem_prelu"] = PRELU_INIT * jnp.ones((stem,), jnp.float32)

    body = []
    for (cin, depth, num_units) in cfg["blocks"]:
        for u in range(num_units):
            ic = cin if u == 0 else depth
            stride = 2 if u == 0 else 1
            unit = dict(
                in_c=ic, depth=depth, stride=stride,
                bn1=_bn_params(nk(), ic),
                conv1=_conv_weight(nk(), depth, ic, 3),
                prelu=PRELU_INIT * jnp.ones((depth,), jnp.float32),
                conv2=_conv_weight(nk(), depth, depth, 3),
                bn2=_bn_params(nk(), depth),
            )
            if ic != depth:    # shortcut: Conv2d(ic, depth, 1, stride) + BN
                unit["sc_conv"] = _conv_weight(nk(), depth, ic, 1)
                unit["sc_bn"] = _bn_params(nk(), depth)
            body.append(unit)
    p["body"] = body

    c1_ch = cfg["blocks"][1][1]
    c2_ch = cfg["blocks"][2][1]
    sd = cfg["style_dim"]
    p["latlayer1_w"] = _conv_weight(nk(), sd, c2_ch, 1)
    p["latlayer1_b"] = 0.1 * jax.random.normal(nk(), (sd,), jnp.float32)
    p["latlayer2_w"] = _conv_weight(nk(), sd, c1_ch, 1)
    p["latlayer2_b"] = 0.1 * jax.random.normal(nk(), (sd,), jnp.float32)

    log_size = int(math.log2(cfg["stylegan_size"]))
    style_count = 2 * log_size - 2
    c3_spatial = cfg["input_size"] // 16
    styles = []
    for j in range(style_count):
        if j < cfg["coarse_ind"]:
            spatial = c3_spatial
        elif j < cfg["middle_ind"]:
            spatial = 2 * c3_spatial
        else:
            spatial = 4 * c3_spatial
        num_pools = int(np.log2(spatial))
        convs = []
        in_c = sd
        for _ in range(num_pools):
            convs.append(dict(w=_conv_weight(nk(), sd, in_c, 3),
                              b=0.1 * jax.random.normal(nk(), (sd,), jnp.float32)))
            in_c = sd
        styles.append(dict(spatial=spatial,
                           lin_w=jax.random.normal(nk(), (sd, sd), jnp.float32),
                           lin_b=0.1 * jax.random.normal(nk(), (sd,), jnp.float32),
                           convs=convs))
    p["styles"] = styles
    return p


def _bn_fold_after_conv(w, bn, conv_bias=None):
    """Fold eval-mode BatchNorm2d that FOLLOWS a conv into its (w, b)."""
    scale = bn["gamma"] / jnp.sqrt(bn["var"] + BN_EPS)
    w_f = w * scale.reshape(-1, 1, 1, 1)
    b0 = jnp.zeros_like(bn["beta"]) if conv_bias is None else conv_bias
    b_f = (b0 - bn["mean"]) * scale + bn["beta"]
    return w_f, b_f


def _bn_affine(x, bn):
    """Eval-mode BatchNorm2d applied as a per-channel affine (NHWC)."""
    scale = bn["gamma"] / jnp.sqrt(bn["var"] + BN_EPS)
    shift = bn["beta"] - bn["mean"] * scale
    return x * scale.reshape(1, 1, 1, -1) + shift.reshape(1, 1, 1, -1)


def bottleneck_ir(x, unit, ops):
    """bottleneck_IR: res(BN->conv3->PReLU->conv3(stride)->BN) + shortcut."""
    stride = unit["stride"]
    if "sc_conv" in unit:
        w_sc, b_sc = _bn_fold_after_conv(unit["sc_conv"], unit["sc_bn"])
        shortcut = ops["conv"](x, w_sc, b_sc, stride=stride, pad=0)
    else:                                   # MaxPool2d(kernel=1, stride)
        shortcut = x[:, ::stride, ::stride, :] if stride > 1 else x
    # The leading BN is applied before zero padding (exact; it cannot be folded
    # into the conv weights because of the zero-padded border); trailing BN is folded.
    xr = _bn_affine(x, unit["bn1"])
    h = ops["conv"](xr, unit["conv1"], None, stride=1, pad=1, act_alpha=unit["prelu"])
    w2, b2 = _bn_fold_after_conv(unit["conv2"], unit["bn2"])
    return ops["conv"](h, w2, b2, stride=stride, pad=1, residual=shortcut)


def gradual_style_block(x, sp, ops, style_dim):
    """GradualStyleBlock: [Conv3x3 s2 + LeakyReLU] * log2(spatial) -> EqualLinear."""
    h = x
    for cp in sp["convs"]:
        h = ops["conv"](h, cp["w"], cp["b"], stride=2, pad=1, act_alpha=LEAKY_SLOPE)
    h = h.reshape(h.shape[0], style_dim)            # x.view(-1, out_c); spatial is 1x1
    # EqualLinear (lr_mul=1): out = x @ (W * 1/sqrt(in)).T + b
    w_mat = jnp.transpose(sp["lin_w"]) * (1.0 / math.sqrt(style_dim))
    return ops["linear"](h, w_mat, sp["lin_b"])


def encoder_forward(x_nchw, params, cfg, ops):
    """GradualStyleEncoder.forward (eval mode).  NCHW in, (B, n_styles, style_dim) out."""
    x = jnp.transpose(jnp.asarray(x_nchw, jnp.float32), (0, 2, 3, 1))    # -> NHWC
    # input_layer: Conv2d(3, 64', 3, 1, 1, bias=False) + BN + PReLU (BN folded)
    w_in, b_in = _bn_fold_after_conv(params["stem_conv"], params["stem_bn"])
    x = ops["conv"](x, w_in, b_in, stride=1, pad=1, act_alpha=params["stem_prelu"])

    c1 = c2 = c3 = None
    for i, unit in enumerate(params["body"]):
        x = bottleneck_ir(x, unit, ops)
        if i == cfg["c1_idx"]:
            c1 = x
        elif i == cfg["c2_idx"]:
            c2 = x
        elif i == cfg["c3_idx"]:
            c3 = x

    sd = cfg["style_dim"]
    styles = params["styles"]
    latents = []
    for j in range(cfg["coarse_ind"]):
        latents.append(gradual_style_block(c3, styles[j], ops, sd))

    lat1 = ops["conv"](c2, params["latlayer1_w"], params["latlayer1_b"], stride=1, pad=0)
    p2 = ops["upsample_add"](c3, lat1)
    for j in range(cfg["coarse_ind"], cfg["middle_ind"]):
        latents.append(gradual_style_block(p2, styles[j], ops, sd))

    lat2 = ops["conv"](c1, params["latlayer2_w"], params["latlayer2_b"], stride=1, pad=0)
    p1 = ops["upsample_add"](p2, lat2)
    for j in range(cfg["middle_ind"], len(styles)):
        latents.append(gradual_style_block(p1, styles[j], ops, sd))

    return jnp.stack(latents, axis=1)       # torch.stack(latents, dim=1)


if __name__ == "__main__":
    B = 2
    key = jax.random.PRNGKey(0)
    kx, kp = jax.random.split(key)
    x = jax.random.normal(
        kx, (B, CFG["in_ch"], CFG["input_size"], CFG["input_size"]), jnp.float32)
    params = make_params(kp, CFG)
    assert len(params["body"]) == 24        # IR-50 body structure (indices 6/20/23 valid)

    out = encoder_forward(x, params, CFG, PALLAS_OPS)
    out = jax.block_until_ready(out)

    ref = encoder_forward(x, params, CFG, REF_OPS)
    ref = jax.block_until_ready(ref)

    n_styles = len(params["styles"])
    assert out.shape == (B, n_styles, CFG["style_dim"]), out.shape
    assert bool(jnp.all(jnp.isfinite(out)))
    rel_err = float(jnp.max(jnp.abs(out - ref)) / (jnp.max(jnp.abs(ref)) + 1e-8))
    assert rel_err < 2e-3, f"mismatch vs reference: rel_err={rel_err}"
    print("KERNEL_OK")
</pallas_src>

<mosaic_0001>
module attributes {stable_mosaic.version = 11 : i64} {
  func.func @_mm_bias_act_kernel(%arg0: i32, %arg1: memref<512x27xf32, #tpu.memory_space<vmem>>, %arg2: memref<27x16xf32, #tpu.memory_space<vmem>>, %arg3: memref<1x16xf32, #tpu.memory_space<vmem>>, %arg4: memref<1x16xf32, #tpu.memory_space<vmem>>, %arg5: memref<512x16xf32, #tpu.memory_space<vmem>>) attributes {dimension_semantics = [#tpu.dimension_semantics<parallel>], iteration_bounds = array<i64: 4>, scalar_prefetch = 0 : i64, scratch_operands = 0 : i64, tpu.core_type = #tpu.core_type<tc>, window_params = [{transform_indices = @transform_0, window_bounds = array<i64: 512, 27>}, {pipeline_mode = #tpu.pipeline_mode<synchronous>, transform_indices = @transform_1, window_bounds = array<i64: 27, 16>}, {pipeline_mode = #tpu.pipeline_mode<synchronous>, transform_indices = @transform_2, window_bounds = array<i64: 1, 16>}, {pipeline_mode = #tpu.pipeline_mode<synchronous>, transform_indices = @transform_3, window_bounds = array<i64: 1, 16>}, {transform_indices = @transform_4, window_bounds = array<i64: 512, 16>}]} {
    %c0 = arith.constant 0 : index
    %c0_0 = arith.constant 0 : index
    %0 = vector.load %arg1[%c0, %c0_0] : memref<512x27xf32, #tpu.memory_space<vmem>>, vector<512x27xf32>
    %c0_1 = arith.constant 0 : index
    %c0_2 = arith.constant 0 : index
    %1 = vector.load %arg2[%c0_1, %c0_2] : memref<27x16xf32, #tpu.memory_space<vmem>>, vector<27x16xf32>
    %cst = arith.constant dense<0.000000e+00> : vector<512x16xf32>
    %2 = tpu.matmul %0, %1, %cst {dimension_numbers = #tpu.dot_dimension_numbers<[1], [0], [0], [1], [0, 0, 1, 1], [], []>} : vector<512x27xf32>, vector<27x16xf32>, vector<512x16xf32> -> vector<512x16xf32>
    %c0_3 = arith.constant 0 : index
    %c0_4 = arith.constant 0 : index
    %3 = vector.load %arg3[%c0_3, %c0_4] : memref<1x16xf32, #tpu.memory_space<vmem>>, vector<1x16xf32>
    %4 = vector.broadcast %3 : vector<1x16xf32> to vector<512x16xf32>
    %5 = arith.addf %2, %4 : vector<512x16xf32>
    %cst_5 = arith.constant 0.000000e+00 : f32
    %6 = vector.broadcast %cst_5 : f32 to vector<512x16xf32>
    %7 = arith.cmpf ogt, %5, %6 : vector<512x16xf32>
    %c0_6 = arith.constant 0 : index
    %c0_7 = arith.constant 0 : index
    %8 = vector.load %arg4[%c0_6, %c0_7] : memref<1x16xf32, #tpu.memory_space<vmem>>, vector<1x16xf32>
    %9 = vector.broadcast %8 : vector<1x16xf32> to vector<512x16xf32>
    %10 = arith.mulf %9, %5 : vector<512x16xf32>
    %11 = arith.select %7, %5, %10 : vector<512x16xi1>, vector<512x16xf32>
    %c0_8 = arith.constant 0 : index
    %c0_9 = arith.constant 0 : index
    %12 = vector.load %arg5[%c0_8, %c0_9] : memref<512x16xf32, #tpu.memory_space<vmem>>, vector<512x16xf32>
    tpu.vector_store %arg5[%c0_8, %c0_9], %11 {strides = array<i32>} : memref<512x16xf32, #tpu.memory_space<vmem>>, vector<512x16xf32>,
    return
  }
  func.func @transform_0(%arg0: i32) -> (i32, i32) {
    %c0_i32 = arith.constant 0 : i32
    %c0_i32_0 = arith.constant 0 : i32
    return %arg0, %c0_i32 : i32, i32
  }
  func.func @transform_1(%arg0: i32) -> (i32, i32) {
    %c0_i32 = arith.constant 0 : i32
    %c0_i32_0 = arith.constant 0 : i32
    %c0_i32_1 = arith.constant 0 : i32
    return %c0_i32, %c0_i32_0 : i32, i32
  }
  func.func @transform_2(%arg0: i32) -> (i32, i32) {
    %c0_i32 = arith.constant 0 : i32
    %c0_i32_0 = arith.constant 0 : i32
    %c0_i32_1 = arith.constant 0 : i32
    return %c0_i32, %c0_i32_0 : i32, i32
  }
  func.func @transform_3(%arg0: i32) -> (i32, i32) {
    %c0_i32 = arith.constant 0 : i32
    %c0_i32_0 = arith.constant 0 : i32
    %c0_i32_1 = arith.constant 0 : i32
    return %c0_i32, %c0_i32_0 : i32, i32
  }
  func.func @transform_4(%arg0: i32) -> (i32, i32) {
    %c0_i32 = arith.constant 0 : i32
    %c0_i32_0 = arith.constant 0 : i32
    return %arg0, %c0_i32 : i32, i32
  }
}

</mosaic_0001>

<llo_original>
// kernel: _fused_mm.1
$region0: #{_fused_mm.1}
  #allocation0 [shape = 'u32[]', space=smem, size = 0x4, offset = 0x4, fixed_abs, tag = 'smem constant byte address 0x4 - core index']
  #allocation1 [shape = 'u32[72,128]{1,0:T(1,128)}', space=vmem, size = 0x9000, scoped, tag = 'internal scratch']
  %s0 = inlined_call_operand.vmem [shape: f32[2048,27], index: 0, kind: input, shape index: {}]
  %s1 = inlined_call_operand.vmem [shape: f32[27,16], index: 1, kind: input, shape index: {}]
  %s2 = inlined_call_operand.vmem [shape: f32[1,16], index: 2, kind: input, shape index: {}]
  %s3 = inlined_call_operand.vmem [shape: f32[1,16], index: 3, kind: input, shape index: {}]
  %s4 = inlined_call_operand.vmem [shape: f32[2048,16], index: 4, kind: output, shape index: {}]
  %s5 = sld [smem:[#allocation0]]
  $region49: #{_fused_mm.1} parent=0
    _
  %s7 = ssub.s32 1, %s5
  %s8 = scalar_select 0, %s7, %s5
  loop: start=0, step=1, limit=6
  $region2: #{_fused_mm.1} parent=0 // loop_pre_header
    _
  $region3: #{_fused_mm.1} parent=0 // loop_header
    %s10 = sphi 0, %s14
    %p11 = scmp.ge.s32.totalorder %s10, 6
    %s20 = sphi 0, %s22
    %s23 = sphi 0, %s20
    %s24 = sphi 0, %s23
    %s40 = sphi 0, %s24
    %s44 = sphi 0, %s44
    %s46 = sphi 0, %s44
    %s47 = sphi 0, %s46
    %s61 = sphi 0, %s47
    %s65 = sphi 0, %s65
    %s67 = sphi 0, %s65
    %s68 = sphi 0, %s67
    %s82 = sphi 0, %s68
    %s86 = sphi 0, %s86
    %s88 = sphi 0, %s86
    %s89 = sphi 0, %s88
    %s103 = sphi 0, %s89
    %s109 = sphi 0, %s111
    %s112 = sphi 0, %s109
    %s113 = sphi 0, %s112
    %s129 = sphi 0, %s113
  $region4: #{_fused_mm.1} parent=0 // loop_header_branch
    %13 = sbr.rel (%p11) target = $region8
  $region5: #{_fused_mm.1} parent=0 // loop_body
    %s15 = ssub.s32 %s10, 1
    %s16 = ssub.s32 %s10, 2
    %s17 = sadd.s32 %s10, 1
    %s18 = ssub.s32 %s10, %s17
    %p19 = scmp.eq.s32.totalorder %s18, 0
    %s21 = sadd.s32 %s20, 1
    %s22 = scalar_select %p19, %s20, %s21
    %p25 = pneg %p19
    %p26 = scmp.eq.s32.totalorder %s10, 3
    %p27 = por %p25, %p26
    %p28 = scmp.ne.s32.totalorder %s20, %s23
    %p29 = scmp.eq.s32.totalorder %s10, 0
    %p30 = por %p28, %p29
    %p31 = scmp.ne.s32.totalorder %s20, %s23
    %p32 = scmp.eq.s32.totalorder %s15, 3
    %p33 = por %p31, %p32
    %p34 = scmp.ne.s32.totalorder %s23, %s24
    %p35 = scmp.eq.s32.totalorder %s15, 0
    %p36 = por %p34, %p35
    %p37 = scmp.ne.s32.totalorder %s23, %s24
    %p38 = scmp.eq.s32.totalorder %s16, 3
    %p39 = por %p37, %p38
    %p41 = scmp.ne.s32.totalorder %s24, %s40
    %p42 = scmp.eq.s32.totalorder %s16, 0
    %p43 = por %p41, %p42
    %s45 = sadd.s32 %s44, 1
    %p48 = scmp.eq.s32.totalorder %s10, 3
    %p49 = scmp.ne.s32.totalorder %s44, %s46
    %p50 = scmp.eq.s32.totalorder %s10, 0
    %p51 = por %p49, %p50
    %p52 = scmp.ne.s32.totalorder %s44, %s46
    %p53 = scmp.eq.s32.totalorder %s15, 3
    %p54 = por %p52, %p53
    %p55 = scmp.ne.s32.totalorder %s46, %s47
    %p56 = scmp.eq.s32.totalorder %s15, 0
    %p57 = por %p55, %p56
    %p58 = scmp.ne.s32.totalorder %s46, %s47
    %p59 = scmp.eq.s32.totalorder %s16, 3
    %p60 = por %p58, %p59
    %p62 = scmp.ne.s32.totalorder %s47, %s61
    %p63 = scmp.eq.s32.totalorder %s16, 0
    %p64 = por %p62, %p63
    %s66 = sadd.s32 %s65, 1
    %p69 = scmp.eq.s32.totalorder %s10, 3
    %p70 = scmp.ne.s32.totalorder %s65, %s67
    %p71 = scmp.eq.s32.totalorder %s10, 0
    %p72 = por %p70, %p71
    %p73 = scmp.ne.s32.totalorder %s65, %s67
    %p74 = scmp.eq.s32.totalorder %s15, 3
    %p75 = por %p73, %p74
    %p76 = scmp.ne.s32.totalorder %s67, %s68
    %p77 = scmp.eq.s32.totalorder %s15, 0
    %p78 = por %p76, %p77
    %p79 = scmp.ne.s32.totalorder %s67, %s68
    %p80 = scmp.eq.s32.totalorder %s16, 3
    %p81 = por %p79, %p80
    %p83 = scmp.ne.s32.totalorder %s68, %s82
    %p84 = scmp.eq.s32.totalorder %s16, 0
    %p85 = por %p83, %p84
    %s87 = sadd.s32 %s86, 1
    %p90 = scmp.eq.s32.totalorder %s10, 3
    %p91 = scmp.ne.s32.totalorder %s86, %s88
    %p92 = scmp.eq.s32.totalorder %s10, 0
    %p93 = por %p91, %p92
    %p94 = scmp.ne.s32.totalorder %s86, %s88
    %p95 = scmp.eq.s32.totalorder %s15, 3
    %p96 = por %p94, %p95
    %p97 = scmp.ne.s32.totalorder %s88, %s89
    %p98 = scmp.eq.s32.totalorder %s15, 0
    %p99 = por %p97, %p98
    %p100 = scmp.ne.s32.totalorder %s88, %s89
    %p101 = scmp.eq.s32.totalorder %s16, 3
    %p102 = por %p100, %p101
    %p104 = scmp.ne.s32.totalorder %s89, %s103
    %p105 = scmp.eq.s32.totalorder %s16, 0
    %p106 = por %p104, %p105
    %s107 = ssub.s32 %s10, %s17
    %p108 = scmp.eq.s32.totalorder %s107, 0
    %s110 = sadd.s32 %s109, 1
    %s111 = scalar_select %p108, %s109, %s110
    %p114 = pneg %p108
    %p115 = scmp.eq.s32.totalorder %s10, 3
    %p116 = por %p114, %p115
    %p117 = scmp.ne.s32.totalorder %s109, %s112
    %p118 = scmp.eq.s32.totalorder %s10, 0
    %p119 = por %p117, %p118
    %p120 = scmp.ne.s32.totalorder %s109, %s112
    %p121 = scmp.eq.s32.totalorder %s15, 3
    %p122 = por %p120, %p121
    %p123 = scmp.ne.s32.totalorder %s112, %s113
    %p124 = scmp.eq.s32.totalorder %s15, 0
    %p125 = por %p123, %p124
    %p126 = scmp.ne.s32.totalorder %s112, %s113
    %p127 = scmp.eq.s32.totalorder %s16, 3
    %p128 = por %p126, %p127
    %p130 = scmp.ne.s32.totalorder %s113, %s129
    %p131 = scmp.eq.s32.totalorder %s16, 0
    %p132 = por %p130, %p131
    %p133 = scmp.le.s32.totalorder 1, %s10
    %p134 = scmp.lt.s32.totalorder %s10, 5
    %p135 = pnand %p133, %p134
    %p136 = pneg %p135
    // Predicated region
    $region9: #{_fused_mm.1} parent=5 // pred_check
      _
    $region10: #{_fused_mm.1} parent=5 // pred_check_branch
      %138 = sbr.rel (%p135) target = $region12
    $region11: #{_fused_mm.1} parent=5 // pred_region
      %s139 = ssub.s32 %s10, 1
      // Predicated region
      $region13: #{_fused_mm.1} parent=11 // pred_check
        %p140 = pneg %p57
      $region14: #{_fused_mm.1} parent=11 // pred_check_branch
        %142 = sbr.rel (%p140) target = $region16
      $region15: #{_fused_mm.1} parent=11 // pred_region
        _
      $region16: #{_fused_mm.1} parent=11 // pred_fallthru
        _
      // Predicated region
      $region17: #{_fused_mm.1} parent=11 // pred_check
        %p143 = pneg %p78
      $region18: #{_fused_mm.1} parent=11 // pred_check_branch
        %145 = sbr.rel (%p143) target = $region20
      $region19: #{_fused_mm.1} parent=11 // pred_region
        _
      $region20: #{_fused_mm.1} parent=11 // pred_fallthru
        _
      // Predicated region
      $region21: #{_fused_mm.1} parent=11 // pred_check
        %p146 = pneg %p99
      $region22: #{_fused_mm.1} parent=11 // pred_check_branch
        %148 = sbr.rel (%p146) target = $region24
      $region23: #{_fused_mm.1} parent=11 // pred_region
        _
      $region24: #{_fused_mm.1} parent=11 // pred_fallthru
        _
    $region12: #{_fused_mm.1} parent=5 // pred_fallthru
      _
    %p149 = scmp.lt.s32.totalorder %s10, 4
    // Predicated region
    $region25: #{_fused_mm.1} parent=5 // pred_check
      %p150 = pneg %p149
    $region26: #{_fused_mm.1} parent=5 // pred_check_branch
      %152 = sbr.rel (%p150) target = $region28
    $region27: #{_fused_mm.1} parent=5 // pred_region
      // Predicated region
      $region29: #{_fused_mm.1} parent=27 // pred_check
        %p153 = pneg %p30
      $region30: #{_fused_mm.1} parent=27 // pred_check_branch
        %155 = sbr.rel (%p153) target = $region32
      $region31: #{_fused_mm.1} parent=27 // pred_region
        %s156 = smul.u32 64, %s10
        %p157 = scmp.lt.s32.totalorder %s156, 255
        %s158 = scalar_select %p157, %s156, 255
        %s159 = smul.addr %s158, 8
        %s160 = scalar_lea.vmem %s0, %s159
        %s161 = smul.u32 64, %s10
      $region32: #{_fused_mm.1} parent=27 // pred_fallthru
        _
    $region28: #{_fused_mm.1} parent=5 // pred_fallthru
      _
    %p162 = scmp.le.s32.totalorder 1, %s10
    %p163 = scmp.lt.s32.totalorder %s10, 5
    %p164 = pnand %p162, %p163
    %p165 = pneg %p164
    // Predicated region
    $region33: #{_fused_mm.1} parent=5 // pred_check
      _
    $region34: #{_fused_mm.1} parent=5 // pred_check_branch
      %167 = sbr.rel (%p164) target = $region36
    $region35: #{_fused_mm.1} parent=5 // pred_region
      %s168 = ssub.s32 %s10, 1
      %s169 = smul.u32 64, %s15
      %p170 = scmp.lt.s32.totalorder %s169, 255
      %s171 = scalar_select %p170, %s169, 255
      %s172 = smul.addr %s171, 8
      %s173 = scalar_lea.vmem %s0, %s172
      %p174 = pneg %p36
      %p175 = pneg %p33
      %p176 = pneg %p57
      %p177 = pneg %p54
      %p178 = pneg %p78
      %p179 = pneg %p75
      %p180 = pneg %p99
      %p181 = pneg %p96
      %p182 = pneg %p125
      %p183 = pneg %p122
      %s184 = smul.u32 64, %s15
      %p185 = scmp.lt.s32.totalorder %s184, 255
      %s186 = scalar_select %p185, %s184, 255
      %s187 = smul.addr %s186, 8
      %s188 = scalar_lea.vmem %s4, %s187
      %s189 = smul.u32 64, %s15
      %p190 = scmp.lt.s32.totalorder %s189, 255
      %s191 = scalar_select %p190, %s189, 255
      %s192 = smul.addr %s191, 8
      %s193 = scalar_lea.vmem %s0, %s192
      %s194 = smul.u32 64, %s15
      %s195 = smul.u32 64, %s15
      %p196 = scmp.lt.s32.totalorder %s195, 255
      %s197 = scalar_select %p196, %s195, 255
      %s198 = smul.addr %s197, 8
      %s199 = scalar_lea.vmem %s4, %s198
      %s200 = smul.u32 64, %s15
      %v201 = vld [vmem:[%s193] sm:$0xff]
      %v202 = vld [vmem:[%s193 + $0x8] sm:$0xff]
      %v203 = vld [vmem:[%s193 + $0x10] sm:$0xff]
      %v204 = vld [vmem:[%s193 + $0x18] sm:$0xff]
      %v205 = vld [vmem:[%s193 + $0x20] sm:$0xff]
      %v206 = vld [vmem:[%s193 + $0x28] sm:$0xff]
      %v207 = vld [vmem:[%s193 + $0x30] sm:$0xff]
      %v208 = vld [vmem:[%s193 + $0x38] sm:$0xff]
      %v209 = vld [vmem:[%s193 + $0x40] sm:$0xff]
      %v210 = vld [vmem:[%s193 + $0x48] sm:$0xff]
      %v211 = vld [vmem:[%s193 + $0x50] sm:$0xff]
      %v212 = vld [vmem:[%s193 + $0x58] sm:$0xff]
      %v213 = vld [vmem:[%s193 + $0x60] sm:$0xff]
      %v214 = vld [vmem:[%s193 + $0x68] sm:$0xff]
      %v215 = vld [vmem:[%s193 + $0x70] sm:$0xff]
      %v216 = vld [vmem:[%s193 + $0x78] sm:$0xff]
      %v217 = vld [vmem:[%s193 + $0x80] sm:$0xff]
      %v218 = vld [vmem:[%s193 + $0x88] sm:$0xff]
      %v219 = vld [vmem:[%s193 + $0x90] sm:$0xff]
      %v220 = vld [vmem:[%s193 + $0x98] sm:$0xff]
      %v221 = vld [vmem:[%s193 + $0xa0] sm:$0xff]
      %v222 = vld [vmem:[%s193 + $0xa8] sm:$0xff]
      %v223 = vld [vmem:[%s193 + $0xb0] sm:$0xff]
      %v224 = vld [vmem:[%s193 + $0xb8] sm:$0xff]
      %v225 = vld [vmem:[%s193 + $0xc0] sm:$0xff]
      %v226 = vld [vmem:[%s193 + $0xc8] sm:$0xff]
      %v227 = vld [vmem:[%s193 + $0xd0] sm:$0xff]
      %v228 = vld [vmem:[%s193 + $0xd8] sm:$0xff]
      %v229 = vld [vmem:[%s193 + $0xe0] sm:$0xff]
      %v230 = vld [vmem:[%s193 + $0xe8] sm:$0xff]
      %v231 = vld [vmem:[%s193 + $0xf0] sm:$0xff]
      %v232 = vld [vmem:[%s193 + $0xf8] sm:$0xff]
      %v233 = vld [vmem:[%s193 + $0x100] sm:$0xff]
      %v234 = vld [vmem:[%s193 + $0x108] sm:$0xff]
      %v235 = vld [vmem:[%s193 + $0x110] sm:$0xff]
      %v236 = vld [vmem:[%s193 + $0x118] sm:$0xff]
      %v237 = vld [vmem:[%s193 + $0x120] sm:$0xff]
      %v238 = vld [vmem:[%s193 + $0x128] sm:$0xff]
      %v239 = vld [vmem:[%s193 + $0x130] sm:$0xff]
      %v240 = vld [vmem:[%s193 + $0x138] sm:$0xff]
      %v241 = vld [vmem:[%s193 + $0x140] sm:$0xff]
      %v242 = vld [vmem:[%s193 + $0x148] sm:$0xff]
      %v243 = vld [vmem:[%s193 + $0x150] sm:$0xff]
      %v244 = vld [vmem:[%s193 + $0x158] sm:$0xff]
      %v245 = vld [vmem:[%s193 + $0x160] sm:$0xff]
      %v246 = vld [vmem:[%s193 + $0x168] sm:$0xff]
      %v247 = vld [vmem:[%s193 + $0x170] sm:$0xff]
      %v248 = vld [vmem:[%s193 + $0x178] sm:$0xff]
      %v249 = vld [vmem:[%s193 + $0x180] sm:$0xff]
      %v250 = vld [vmem:[%s193 + $0x188] sm:$0xff]
      %v251 = vld [vmem:[%s193 + $0x190] sm:$0xff]
      %v252 = vld [vmem:[%s193 + $0x198] sm:$0xff]
      %v253 = vld [vmem:[%s193 + $0x1a0] sm:$0xff]
      %v254 = vld [vmem:[%s193 + $0x1a8] sm:$0xff]
      %v255 = vld [vmem:[%s193 + $0x1b0] sm:$0xff]
      %v256 = vld [vmem:[%s193 + $0x1b8] sm:$0xff]
      %v257 = vld [vmem:[%s193 + $0x1c0] sm:$0xff]
      %v258 = vld [vmem:[%s193 + $0x1c8] sm:$0xff]
      %v259 = vld [vmem:[%s193 + $0x1d0] sm:$0xff]
      %v260 = vld [vmem:[%s193 + $0x1d8] sm:$0xff]
      %v261 = vld [vmem:[%s193 + $0x1e0] sm:$0xff]
      %v262 = vld [vmem:[%s193 + $0x1e8] sm:$0xff]
      %v263 = vld [vmem:[%s193 + $0x1f0] sm:$0xff]
      %v264 = vld [vmem:[%s193 + $0x1f8] sm:$0xff]
      %v265 = vld [vmem:[%s1] sm:$0xff]
      %v266 = vld [vmem:[%s1 + $0x8] sm:$0xff]
      %v267 = vld [vmem:[%s1 + $0x10] sm:$0xff]
      %v268 = vld [vmem:[%s1 + $0x18] sm:$0x7]
      %v269 = vld [vmem:[%s2] sm:$0x1]
      %v271 = vperm.slane %v269, 0
      %vm273 = vcmask 220160
      %v275 = vsel %vm273, %v201, 0
      %v278 = vsel %vm273, %v202, 0
      %v281 = vsel %vm273, %v203, 0
      %v284 = vsel %vm273, %v204, 0
      %v287 = vsel %vm273, %v205, 0
      %v290 = vsel %vm273, %v206, 0
      %v293 = vsel %vm273, %v207, 0
      %v296 = vsel %vm273, %v208, 0
      %v299 = vsel %vm273, %v209, 0
      %v302 = vsel %vm273, %v210, 0
      %v305 = vsel %vm273, %v211, 0
      %v308 = vsel %vm273, %v212, 0
      %v311 = vsel %vm273, %v213, 0
      %v314 = vsel %vm273, %v214, 0
      %v317 = vsel %vm273, %v215, 0
      %v320 = vsel %vm273, %v216, 0
      %v323 = vsel %vm273, %v217, 0
      %v326 = vsel %vm273, %v218, 0
      %v329 = vsel %vm273, %v219, 0
      %v332 = vsel %vm273, %v220, 0
      %v335 = vsel %vm273, %v221, 0
      %v338 = vsel %vm273, %v222, 0
      %v341 = vsel %vm273, %v223, 0
      %v344 = vsel %vm273, %v224, 0
      %v347 = vsel %vm273, %v225, 0
      %v350 = vsel %vm273, %v226, 0
      %v353 = vsel %vm273, %v227, 0
      %v356 = vsel %vm273, %v228, 0
      %v359 = vsel %vm273, %v229, 0
      %v362 = vsel %vm273, %v230, 0
      %v365 = vsel %vm273, %v231, 0
      %v368 = vsel %vm273, %v232, 0
      %v371 = vsel %vm273, %v233, 0
      %v374 = vsel %vm273, %v234, 0
      %v377 = vsel %vm273, %v235, 0
      %v380 = vsel %vm273, %v236, 0
      %v383 = vsel %vm273, %v237, 0
      %v386 = vsel %vm273, %v238, 0
      %v389 = vsel %vm273, %v239, 0
      %v392 = vsel %vm273, %v240, 0
      %v395 = vsel %vm273, %v241, 0
      %v398 = vsel %vm273, %v242, 0
      %v401 = vsel %vm273, %v243, 0
      %v404 = vsel %vm273, %v244, 0
      %v407 = vsel %vm273, %v245, 0
      %v410 = vsel %vm273, %v246, 0
      %v413 = vsel %vm273, %v247, 0
      %v416 = vsel %vm273, %v248, 0
      %v419 = vsel %vm273, %v249, 0
      %v422 = vsel %vm273, %v250, 0
      %v425 = vsel %vm273, %v251, 0
      %v428 = vsel %vm273, %v252, 0
      %v431 = vsel %vm273, %v253, 0
      %v434 = vsel %vm273, %v254, 0
      %v437 = vsel %vm273, %v255, 0
      %v440 = vsel %vm273, %v256, 0
      %v443 = vsel %vm273, %v257, 0
      %v446 = vsel %vm273, %v258, 0
      %v449 = vsel %vm273, %v259, 0
      %v452 = vsel %vm273, %v260, 0
      %v455 = vsel %vm273, %v261, 0
      %v458 = vsel %vm273, %v262, 0
      %v461 = vsel %vm273, %v263, 0
      %v464 = vsel %vm273, %v264, 0
      %vm466 = vcmask 1042432
      %v468 = vsel %vm466, %v268, 0
      %470 = vmatpush.msra.mxu0 0.0
      %471 = vmatpush.msra.mxu0 0.0
      %472 = vmatpush.msra.mxu0 0.0
      %473 = vmatpush.msra.mxu0 0.0
      %474 = vmatpush.msra.mxu0 0.0
      %475 = vmatpush.msra.mxu0 0.0
      %476 = vmatpush.msra.mxu0 0.0
      %477 = vmatpush.msra.mxu0 0.0
      %478 = vmatpush.msra.mxu0 0.0
      %479 = vmatpush.msra.mxu0 0.0
      %480 = vmatpush.msra.mxu0 0.0
      %481 = vmatpush.msra.mxu0 0.0
      %482 = vmatpush.msra.mxu0 %v468
      %483 = vmatpush.msra.mxu0 %v267
      %484 = vmatpush.msra.mxu0 %v266
      %485 = vmatpush.msra.mxu0 %v265
      %486 = vmatmul.f32.gmra.mxu0 %v275
      %v487 = vpop.f32.mrf.mxu0
      %v488 = vadd.f32 %v271, %v487
      %489 = vmatmul.f32.gmra.mxu0 %v278
      %v490 = vpop.f32.mrf.mxu0
      %v491 = vadd.f32 %v271, %v490
      %492 = vmatmul.f32.gmra.mxu0 %v281
      %v493 = vpop.f32.mrf.mxu0
      %v494 = vadd.f32 %v271, %v493
      %495 = vmatmul.f32.gmra.mxu0 %v284
      %v496 = vpop.f32.mrf.mxu0
      %v497 = vadd.f32 %v271, %v496
      %498 = vmatmul.f32.gmra.mxu0 %v287
      %v499 = vpop.f32.mrf.mxu0
      %v500 = vadd.f32 %v271, %v499
      %501 = vmatmul.f32.gmra.mxu0 %v290
      %v502 = vpop.f32.mrf.mxu0
      %v503 = vadd.f32 %v271, %v502
      %504 = vmatmul.f32.gmra.mxu0 %v293
      %v505 = vpop.f32.mrf.mxu0
      %v506 = vadd.f32 %v271, %v505
      %507 = vmatmul.f32.gmra.mxu0 %v296
      %v508 = vpop.f32.mrf.mxu0
      %v509 = vadd.f32 %v271, %v508
      %510 = vmatmul.f32.gmra.mxu0 %v299
      %v511 = vpop.f32.mrf.mxu0
      %v512 = vadd.f32 %v271, %v511
      %513 = vmatmul.f32.gmra.mxu0 %v302
      %v514 = vpop.f32.mrf.mxu0
      %v515 = vadd.f32 %v271, %v514
      %516 = vmatmul.f32.gmra.mxu0 %v305
      %v517 = vpop.f32.mrf.mxu0
      %v518 = vadd.f32 %v271, %v517
      %519 = vmatmul.f32.gmra.mxu0 %v308
      %v520 = vpop.f32.mrf.mxu0
      %v521 = vadd.f32 %v271, %v520
      %522 = vmatmul.f32.gmra.mxu0 %v311
      %v523 = vpop.f32.mrf.mxu0
      %v524 = vadd.f32 %v271, %v523
      %525 = vmatmul.f32.gmra.mxu0 %v314
      %v526 = vpop.f32.mrf.mxu0
      %v527 = vadd.f32 %v271, %v526
      %528 = vmatmul.f32.gmra.mxu0 %v317
      %v529 = vpop.f32.mrf.mxu0
      %v530 = vadd.f32 %v271, %v529
      %531 = vmatmul.f32.gmra.mxu0 %v320
      %v532 = vpop.f32.mrf.mxu0
      %v533 = vadd.f32 %v271, %v532
      %534 = vmatmul.f32.gmra.mxu0 %v323
      %v535 = vpop.f32.mrf.mxu0
      %v536 = vadd.f32 %v271, %v535
      %537 = vmatmul.f32.gmra.mxu0 %v326
      %v538 = vpop.f32.mrf.mxu0
      %v539 = vadd.f32 %v271, %v538
      %540 = vmatmul.f32.gmra.mxu0 %v329
      %v541 = vpop.f32.mrf.mxu0
      %v542 = vadd.f32 %v271, %v541
      %543 = vmatmul.f32.gmra.mxu0 %v332
      %v544 = vpop.f32.mrf.mxu0
      %v545 = vadd.f32 %v271, %v544
      %546 = vmatmul.f32.gmra.mxu0 %v335
      %v547 = vpop.f32.mrf.mxu0
      %v548 = vadd.f32 %v271, %v547
      %549 = vmatmul.f32.gmra.mxu0 %v338
      %v550 = vpop.f32.mrf.mxu0
      %v551 = vadd.f32 %v271, %v550
      %552 = vmatmul.f32.gmra.mxu0 %v341
      %v553 = vpop.f32.mrf.mxu0
      %v554 = vadd.f32 %v271, %v553
      %555 = vmatmul.f32.gmra.mxu0 %v344
      %v556 = vpop.f32.mrf.mxu0
      %v557 = vadd.f32 %v271, %v556
      %558 = vmatmul.f32.gmra.mxu0 %v347
      %v559 = vpop.f32.mrf.mxu0
      %v560 = vadd.f32 %v271, %v559
      %561 = vmatmul.f32.gmra.mxu0 %v350
      %v562 = vpop.f32.mrf.mxu0
      %v563 = vadd.f32 %v271, %v562
      %564 = vmatmul.f32.gmra.mxu0 %v353
      %v565 = vpop.f32.mrf.mxu0
      %v566 = vadd.f32 %v271, %v565
      %567 = vmatmul.f32.gmra.mxu0 %v356
      %v568 = vpop.f32.mrf.mxu0
      %v569 = vadd.f32 %v271, %v568
      %570 = vmatmul.f32.gmra.mxu0 %v359
      %v571 = vpop.f32.mrf.mxu0
      %v572 = vadd.f32 %v271, %v571
      %573 = vmatmul.f32.gmra.mxu0 %v362
      %v574 = vpop.f32.mrf.mxu0
      %v575 = vadd.f32 %v271, %v574
      %576 = vmatmul.f32.gmra.mxu0 %v365
      %v577 = vpop.f32.mrf.mxu0
      %v578 = vadd.f32 %v271, %v577
      %579 = vmatmul.f32.gmra.mxu0 %v368
      %v580 = vpop.f32.mrf.mxu0
      %v581 = vadd.f32 %v271, %v580
      %582 = vmatmul.f32.gmra.mxu0 %v371
      %v583 = vpop.f32.mrf.mxu0
      %v584 = vadd.f32 %v271, %v583
      %585 = vmatmul.f32.gmra.mxu0 %v374
      %v586 = vpop.f32.mrf.mxu0
      %v587 = vadd.f32 %v271, %v586
      %588 = vmatmul.f32.gmra.mxu0 %v377
      %v589 = vpop.f32.mrf.mxu0
      %v590 = vadd.f32 %v271, %v589
      %591 = vmatmul.f32.gmra.mxu0 %v380
      %v592 = vpop.f32.mrf.mxu0
      %v593 = vadd.f32 %v271, %v592
      %594 = vmatmul.f32.gmra.mxu0 %v383
      %v595 = vpop.f32.mrf.mxu0
      %v596 = vadd.f32 %v271, %v595
      %597 = vmatmul.f32.gmra.mxu0 %v386
      %v598 = vpop.f32.mrf.mxu0
      %v599 = vadd.f32 %v271, %v598
      %600 = vmatmul.f32.gmra.mxu0 %v389
      %v601 = vpop.f32.mrf.mxu0
      %v602 = vadd.f32 %v271, %v601
      %603 = vmatmul.f32.gmra.mxu0 %v392
      %v604 = vpop.f32.mrf.mxu0
      %v605 = vadd.f32 %v271, %v604
      %606 = vmatmul.f32.gmra.mxu0 %v395
      %v607 = vpop.f32.mrf.mxu0
      %v608 = vadd.f32 %v271, %v607
      %609 = vmatmul.f32.gmra.mxu0 %v398
      %v610 = vpop.f32.mrf.mxu0
      %v611 = vadd.f32 %v271, %v610
      %612 = vmatmul.f32.gmra.mxu0 %v401
      %v613 = vpop.f32.mrf.mxu0
      %v614 = vadd.f32 %v271, %v613
      %615 = vmatmul.f32.gmra.mxu0 %v404
      %v616 = vpop.f32.mrf.mxu0
      %v617 = vadd.f32 %v271, %v616
      %618 = vmatmul.f32.gmra.mxu0 %v407
      %v619 = vpop.f32.mrf.mxu0
      %v620 = vadd.f32 %v271, %v619
      %621 = vmatmul.f32.gmra.mxu0 %v410
      %v622 = vpop.f32.mrf.mxu0
      %v623 = vadd.f32 %v271, %v622
      %624 = vmatmul.f32.gmra.mxu0 %v413
      %v625 = vpop.f32.mrf.mxu0
      %v626 = vadd.f32 %v271, %v625
      %627 = vmatmul.f32.gmra.mxu0 %v416
      %v628 = vpop.f32.mrf.mxu0
      %v629 = vadd.f32 %v271, %v628
      %630 = vmatmul.f32.gmra.mxu0 %v419
      %v631 = vpop.f32.mrf.mxu0
      %v632 = vadd.f32 %v271, %v631
      %633 = vmatmul.f32.gmra.mxu0 %v422
      %v634 = vpop.f32.mrf.mxu0
      %v635 = vadd.f32 %v271, %v634
      %636 = vmatmul.f32.gmra.mxu0 %v425
      %v637 = vpop.f32.mrf.mxu0
      %v638 = vadd.f32 %v271, %v637
      %639 = vmatmul.f32.gmra.mxu0 %v428
      %v640 = vpop.f32.mrf.mxu0
      %v641 = vadd.f32 %v271, %v640
      %642 = vmatmul.f32.gmra.mxu0 %v431
      %v643 = vpop.f32.mrf.mxu0
      %v644 = vadd.f32 %v271, %v643
      %645 = vmatmul.f32.gmra.mxu0 %v434
      %v646 = vpop.f32.mrf.mxu0
      %v647 = vadd.f32 %v271, %v646
      %648 = vmatmul.f32.gmra.mxu0 %v437
      %v649 = vpop.f32.mrf.mxu0
      %v650 = vadd.f32 %v271, %v649
      %651 = vmatmul.f32.gmra.mxu0 %v440
      %v652 = vpop.f32.mrf.mxu0
      %v653 = vadd.f32 %v271, %v652
      %654 = vmatmul.f32.gmra.mxu0 %v443
      %v655 = vpop.f32.mrf.mxu0
      %v656 = vadd.f32 %v271, %v655
      %657 = vmatmul.f32.gmra.mxu0 %v446
      %v658 = vpop.f32.mrf.mxu0
      %v659 = vadd.f32 %v271, %v658
      %660 = vmatmul.f32.gmra.mxu0 %v449
      %v661 = vpop.f32.mrf.mxu0
      %v662 = vadd.f32 %v271, %v661
      %663 = vmatmul.f32.gmra.mxu0 %v452
      %v664 = vpop.f32.mrf.mxu0
      %v665 = vadd.f32 %v271, %v664
      %666 = vmatmul.f32.gmra.mxu0 %v455
      %v667 = vpop.f32.mrf.mxu0
      %v668 = vadd.f32 %v271, %v667
      %669 = vmatmul.f32.gmra.mxu0 %v458
      %v670 = vpop.f32.mrf.mxu0
      %v671 = vadd.f32 %v271, %v670
      %672 = vmatmul.f32.gmra.mxu0 %v461
      %v673 = vpop.f32.mrf.mxu0
      %v674 = vadd.f32 %v271, %v673
      %675 = vmatmul.f32.gmra.mxu0 %v464
      %v676 = vpop.f32.mrf.mxu0
      %v677 = vadd.f32 %v271, %v676
      %678 = vdwg.mxu0
      %vm679 = vcmp.gt.f32.partialorder %v488, 0.0
      %vm680 = vcmp.gt.f32.partialorder %v491, 0.0
      %vm681 = vcmp.gt.f32.partialorder %v494, 0.0
      %vm682 = vcmp.gt.f32.partialorder %v497, 0.0
      %vm683 = vcmp.gt.f32.partialorder %v500, 0.0
      %vm684 = vcmp.gt.f32.partialorder %v503, 0.0
      %vm685 = vcmp.gt.f32.partialorder %v506, 0.0
      %vm686 = vcmp.gt.f32.partialorder %v509, 0.0
      %vm687 = vcmp.gt.f32.partialorder %v512, 0.0
      %vm688 = vcmp.gt.f32.partialorder %v515, 0.0
      %vm689 = vcmp.gt.f32.partialorder %v518, 0.0
      %vm690 = vcmp.gt.f32.partialorder %v521, 0.0
      %vm691 = vcmp.gt.f32.partialorder %v524, 0.0
      %vm692 = vcmp.gt.f32.partialorder %v527, 0.0
      %vm693 = vcmp.gt.f32.partialorder %v530, 0.0
      %vm694 = vcmp.gt.f32.partialorder %v533, 0.0
      %vm695 = vcmp.gt.f32.partialorder %v536, 0.0
      %vm696 = vcmp.gt.f32.partialorder %v539, 0.0
      %vm697 = vcmp.gt.f32.partialorder %v542, 0.0
      %vm698 = vcmp.gt.f32.partialorder %v545, 0.0
      %vm699 = vcmp.gt.f32.partialorder %v548, 0.0
      %vm700 = vcmp.gt.f32.partialorder %v551, 0.0
      %vm701 = vcmp.gt.f32.partialorder %v554, 0.0
      %vm702 = vcmp.gt.f32.partialorder %v557, 0.0
      %vm703 = vcmp.gt.f32.partialorder %v560, 0.0
      %vm704 = vcmp.gt.f32.partialorder %v563, 0.0
      %vm705 = vcmp.gt.f32.partialorder %v566, 0.0
      %vm706 = vcmp.gt.f32.partialorder %v569, 0.0
      %vm707 = vcmp.gt.f32.partialorder %v572, 0.0
      %vm708 = vcmp.gt.f32.partialorder %v575, 0.0
      %vm709 = vcmp.gt.f32.partialorder %v578, 0.0
      %vm710 = vcmp.gt.f32.partialorder %v581, 0.0
      %vm711 = vcmp.gt.f32.partialorder %v584, 0.0
      %vm712 = vcmp.gt.f32.partialorder %v587, 0.0
      %vm713 = vcmp.gt.f32.partialorder %v590, 0.0
      %vm714 = vcmp.gt.f32.partialorder %v593, 0.0
      %vm715 = vcmp.gt.f32.partialorder %v596, 0.0
      %vm716 = vcmp.gt.f32.partialorder %v599, 0.0
      %vm717 = vcmp.gt.f32.partialorder %v602, 0.0
      %vm718 = vcmp.gt.f32.partialorder %v605, 0.0
      %vm719 = vcmp.gt.f32.partialorder %v608, 0.0
      %vm720 = vcmp.gt.f32.partialorder %v611, 0.0
      %vm721 = vcmp.gt.f32.partialorder %v614, 0.0
      %vm722 = vcmp.gt.f32.partialorder %v617, 0.0
      %vm723 = vcmp.gt.f32.partialorder %v620, 0.0
      %vm724 = vcmp.gt.f32.partialorder %v623, 0.0
      %vm725 = vcmp.gt.f32.partialorder %v626, 0.0
      %vm726 = vcmp.gt.f32.partialorder %v629, 0.0
      %vm727 = vcmp.gt.f32.partialorder %v632, 0.0
      %vm728 = vcmp.gt.f32.partialorder %v635, 0.0
      %vm729 = vcmp.gt.f32.partialorder %v638, 0.0
      %vm730 = vcmp.gt.f32.partialorder %v641, 0.0
      %vm731 = vcmp.gt.f32.partialorder %v644, 0.0
      %vm732 = vcmp.gt.f32.partialorder %v647, 0.0
      %vm733 = vcmp.gt.f32.partialorder %v650, 0.0
      %vm734 = vcmp.gt.f32.partialorder %v653, 0.0
      %vm735 = vcmp.gt.f32.partialorder %v656, 0.0
      %vm736 = vcmp.gt.f32.partialorder %v659, 0.0
      %vm737 = vcmp.gt.f32.partialorder %v662, 0.0
      %vm738 = vcmp.gt.f32.partialorder %v665, 0.0
      %vm739 = vcmp.gt.f32.partialorder %v668, 0.0
      %vm740 = vcmp.gt.f32.partialorder %v671, 0.0
      %vm741 = vcmp.gt.f32.partialorder %v674, 0.0
      %vm742 = vcmp.gt.f32.partialorder %v677, 0.0
      %v743 = vld [vmem:[%s3] sm:$0x1]
      %v745 = vperm.slane %v743, 0
      %v747 = vmul.f32 %v745, %v488
      %v748 = vmul.f32 %v745, %v491
      %v749 = vmul.f32 %v745, %v494
      %v750 = vmul.f32 %v745, %v497
      %v751 = vmul.f32 %v745, %v500
      %v752 = vmul.f32 %v745, %v503
      %v753 = vmul.f32 %v745, %v506
      %v754 = vmul.f32 %v745, %v509
      %v755 = vmul.f32 %v745, %v512
      %v756 = vmul.f32 %v745, %v515
      %v757 = vmul.f32 %v745, %v518
      %v758 = vmul.f32 %v745, %v521
      %v759 = vmul.f32 %v745, %v524
      %v760 = vmul.f32 %v745, %v527
      %v761 = vmul.f32 %v745, %v530
      %v762 = vmul.f32 %v745, %v533
      %v763 = vmul.f32 %v745, %v536
      %v764 = vmul.f32 %v745, %v539
      %v765 = vmul.f32 %v745, %v542
      %v766 = vmul.f32 %v745, %v545
      %v767 = vmul.f32 %v745, %v548
      %v768 = vmul.f32 %v745, %v551
      %v769 = vmul.f32 %v745, %v554
      %v770 = vmul.f32 %v745, %v557
      %v771 = vmul.f32 %v745, %v560
      %v772 = vmul.f32 %v745, %v563
      %v773 = vmul.f32 %v745, %v566
      %v774 = vmul.f32 %v745, %v569
      %v775 = vmul.f32 %v745, %v572
      %v776 = vmul.f32 %v745, %v575
      %v777 = vmul.f32 %v745, %v578
      %v778 = vmul.f32 %v745, %v581
      %v779 = vmul.f32 %v745, %v584
      %v780 = vmul.f32 %v745, %v587
      %v781 = vmul.f32 %v745, %v590
      %v782 = vmul.f32 %v745, %v593
      %v783 = vmul.f32 %v745, %v596
      %v784 = vmul.f32 %v745, %v599
      %v785 = vmul.f32 %v745, %v602
      %v786 = vmul.f32 %v745, %v605
      %v787 = vmul.f32 %v745, %v608
      %v788 = vmul.f32 %v745, %v611
      %v789 = vmul.f32 %v745, %v614
      %v790 = vmul.f32 %v745, %v617
      %v791 = vmul.f32 %v745, %v620
      %v792 = vmul.f32 %v745, %v623
      %v793 = vmul.f32 %v745, %v626
      %v794 = vmul.f32 %v745, %v629
      %v795 = vmul.f32 %v745, %v632
      %v796 = vmul.f32 %v745, %v635
      %v797 = vmul.f32 %v745, %v638
      %v798 = vmul.f32 %v745, %v641
      %v799 = vmul.f32 %v745, %v644
      %v800 = vmul.f32 %v745, %v647
      %v801 = vmul.f32 %v745, %v650
      %v802 = vmul.f32 %v745, %v653
      %v803 = vmul.f32 %v745, %v656
      %v804 = vmul.f32 %v745, %v659
      %v805 = vmul.f32 %v745, %v662
      %v806 = vmul.f32 %v745, %v665
      %v807 = vmul.f32 %v745, %v668
      %v808 = vmul.f32 %v745, %v671
      %v809 = vmul.f32 %v745, %v674
      %v810 = vmul.f32 %v745, %v677
      %v811 = vsel %vm679, %v488, %v747
      %v812 = vsel %vm680, %v491, %v748
      %v813 = vsel %vm681, %v494, %v749
      %v814 = vsel %vm682, %v497, %v750
      %v815 = vsel %vm683, %v500, %v751
      %v816 = vsel %vm684, %v503, %v752
      %v817 = vsel %vm685, %v506, %v753
      %v818 = vsel %vm686, %v509, %v754
      %v819 = vsel %vm687, %v512, %v755
      %v820 = vsel %vm688, %v515, %v756
      %v821 = vsel %vm689, %v518, %v757
      %v822 = vsel %vm690, %v521, %v758
      %v823 = vsel %vm691, %v524, %v759
      %v824 = vsel %vm692, %v527, %v760
      %v825 = vsel %vm693, %v530, %v761
      %v826 = vsel %vm694, %v533, %v762
      %v827 = vsel %vm695, %v536, %v763
      %v828 = vsel %vm696, %v539, %v764
      %v829 = vsel %vm697, %v542, %v765
      %v830 = vsel %vm698, %v545, %v766
      %v831 = vsel %vm699, %v548, %v767
      %v832 = vsel %vm700, %v551, %v768
      %v833 = vsel %vm701, %v554, %v769
      %v834 = vsel %vm702, %v557, %v770
      %v835 = vsel %vm703, %v560, %v771
      %v836 = vsel %vm704, %v563, %v772
      %v837 = vsel %vm705, %v566, %v773
      %v838 = vsel %vm706, %v569, %v774
      %v839 = vsel %vm707, %v572, %v775
      %v840 = vsel %vm708, %v575, %v776
      %v841 = vsel %vm709, %v578, %v777
      %v842 = vsel %vm710, %v581, %v778
      %v843 = vsel %vm711, %v584, %v779
      %v844 = vsel %vm712, %v587, %v780
      %v845 = vsel %vm713, %v590, %v781
      %v846 = vsel %vm714, %v593, %v782
      %v847 = vsel %vm715, %v596, %v783
      %v848 = vsel %vm716, %v599, %v784
      %v849 = vsel %vm717, %v602, %v785
      %v850 = vsel %vm718, %v605, %v786
      %v851 = vsel %vm719, %v608, %v787
      %v852 = vsel %vm720, %v611, %v788
      %v853 = vsel %vm721, %v614, %v789
      %v854 = vsel %vm722, %v617, %v790
      %v855 = vsel %vm723, %v620, %v791
      %v856 = vsel %vm724, %v623, %v792
      %v857 = vsel %vm725, %v626, %v793
      %v858 = vsel %vm726, %v629, %v794
      %v859 = vsel %vm727, %v632, %v795
      %v860 = vsel %vm728, %v635, %v796
      %v861 = vsel %vm729, %v638, %v797
      %v862 = vsel %vm730, %v641, %v798
      %v863 = vsel %vm731, %v644, %v799
      %v864 = vsel %vm732, %v647, %v800
      %v865 = vsel %vm733, %v650, %v801
      %v866 = vsel %vm734, %v653, %v802
      %v867 = vsel %vm735, %v656, %v803
      %v868 = vsel %vm736, %v659, %v804
      %v869 = vsel %vm737, %v662, %v805
      %v870 = vsel %vm738, %v665, %v806
      %v871 = vsel %vm739, %v668, %v807
      %v872 = vsel %vm740, %v671, %v808
      %v873 = vsel %vm741, %v674, %v809
      %v874 = vsel %vm742, %v677, %v810
      %vm875 = vcmask 130048
      %876 = vst.msk [vmem:[%s199] sm:$0xff] %vm875, %v811
      %877 = vst.msk [vmem:[%s199 + $0x8] sm:$0xff] %vm875, %v812
      %878 = vst.msk [vmem:[%s199 + $0x10] sm:$0xff] %vm875, %v813
      %879 = vst.msk [vmem:[%s199 + $0x18] sm:$0xff] %vm875, %v814
      %880 = vst.msk [vmem:[%s199 + $0x20] sm:$0xff] %vm875, %v815
      %881 = vst.msk [vmem:[%s199 + $0x28] sm:$0xff] %vm875, %v816
      %882 = vst.msk [vmem:[%s199 + $0x30] sm:$0xff] %vm875, %v817
      %883 = vst.msk [vmem:[%s199 + $0x38] sm:$0xff] %vm875, %v818
      %884 = vst.msk [vmem:[%s199 + $0x40] sm:$0xff] %vm875, %v819
      %885 = vst.msk [vmem:[%s199 + $0x48] sm:$0xff] %vm875, %v820
      %886 = vst.msk [vmem:[%s199 + $0x50] sm:$0xff] %vm875, %v821
      %887 = vst.msk [vmem:[%s199 + $0x58] sm:$0xff] %vm875, %v822
      %888 = vst.msk [vmem:[%s199 + $0x60] sm:$0xff] %vm875, %v823
      %889 = vst.msk [vmem:[%s199 + $0x68] sm:$0xff] %vm875, %v824
      %890 = vst.msk [vmem:[%s199 + $0x70] sm:$0xff] %vm875, %v825
      %891 = vst.msk [vmem:[%s199 + $0x78] sm:$0xff] %vm875, %v826
      %892 = vst.msk [vmem:[%s199 + $0x80] sm:$0xff] %vm875, %v827
      %893 = vst.msk [vmem:[%s199 + $0x88] sm:$0xff] %vm875, %v828
      %894 = vst.msk [vmem:[%s199 + $0x90] sm:$0xff] %vm875, %v829
      %895 = vst.msk [vmem:[%s199 + $0x98] sm:$0xff] %vm875, %v830
      %896 = vst.msk [vmem:[%s199 + $0xa0] sm:$0xff] %vm875, %v831
      %897 = vst.msk [vmem:[%s199 + $0xa8] sm:$0xff] %vm875, %v832
      %898 = vst.msk [vmem:[%s199 + $0xb0] sm:$0xff] %vm875, %v833
      %899 = vst.msk [vmem:[%s199 + $0xb8] sm:$0xff] %vm875, %v834
      %900 = vst.msk [vmem:[%s199 + $0xc0] sm:$0xff] %vm875, %v835
      %901 = vst.msk [vmem:[%s199 + $0xc8] sm:$0xff] %vm875, %v836
      %902 = vst.msk [vmem:[%s199 + $0xd0] sm:$0xff] %vm875, %v837
      %903 = vst.msk [vmem:[%s199 + $0xd8] sm:$0xff] %vm875, %v838
      %904 = vst.msk [vmem:[%s199 + $0xe0] sm:$0xff] %vm875, %v839
      %905 = vst.msk [vmem:[%s199 + $0xe8] sm:$0xff] %vm875, %v840
      %906 = vst.msk [vmem:[%s199 + $0xf0] sm:$0xff] %vm875, %v841
      %907 = vst.msk [vmem:[%s199 + $0xf8] sm:$0xff] %vm875, %v842
      %908 = vst.msk [vmem:[%s199 + $0x100] sm:$0xff] %vm875, %v843
      %909 = vst.msk [vmem:[%s199 + $0x108] sm:$0xff] %vm875, %v844
      %910 = vst.msk [vmem:[%s199 + $0x110] sm:$0xff] %vm875, %v845
      %911 = vst.msk [vmem:[%s199 + $0x118] sm:$0xff] %vm875, %v846
      %912 = vst.msk [vmem:[%s199 + $0x120] sm:$0xff] %vm875, %v847
      %913 = vst.msk [vmem:[%s199 + $0x128] sm:$0xff] %vm875, %v848
      %914 = vst.msk [vmem:[%s199 + $0x130] sm:$0xff] %vm875, %v849
      %915 = vst.msk [vmem:[%s199 + $0x138] sm:$0xff] %vm875, %v850
      %916 = vst.msk [vmem:[%s199 + $0x140] sm:$0xff] %vm875, %v851
      %917 = vst.msk [vmem:[%s199 + $0x148] sm:$0xff] %vm875, %v852
      %918 = vst.msk [vmem:[%s199 + $0x150] sm:$0xff] %vm875, %v853
      %919 = vst.msk [vmem:[%s199 + $0x158] sm:$0xff] %vm875, %v854
      %920 = vst.msk [vmem:[%s199 + $0x160] sm:$0xff] %vm875, %v855
      %921 = vst.msk [vmem:[%s199 + $0x168] sm:$0xff] %vm875, %v856
      %922 = vst.msk [vmem:[%s199 + $0x170] sm:$0xff] %vm875, %v857
      %923 = vst.msk [vmem:[%s199 + $0x178] sm:$0xff] %vm875, %v858
      %924 = vst.msk [vmem:[%s199 + $0x180] sm:$0xff] %vm875, %v859
      %925 = vst.msk [vmem:[%s199 + $0x188] sm:$0xff] %vm875, %v860
      %926 = vst.msk [vmem:[%s199 + $0x190] sm:$0xff] %vm875, %v861
      %927 = vst.msk [vmem:[%s199 + $0x198] sm:$0xff] %vm875, %v862
      %928 = vst.msk [vmem:[%s199 + $0x1a0] sm:$0xff] %vm875, %v863
      %929 = vst.msk [vmem:[%s199 + $0x1a8] sm:$0xff] %vm875, %v864
      %930 = vst.msk [vmem:[%s199 + $0x1b0] sm:$0xff] %vm875, %v865
      %931 = vst.msk [vmem:[%s199 + $0x1b8] sm:$0xff] %vm875, %v866
      %932 = vst.msk [vmem:[%s199 + $0x1c0] sm:$0xff] %vm875, %v867
      %933 = vst.msk [vmem:[%s199 + $0x1c8] sm:$0xff] %vm875, %v868
      %934 = vst.msk [vmem:[%s199 + $0x1d0] sm:$0xff] %vm875, %v869
      %935 = vst.msk [vmem:[%s199 + $0x1d8] sm:$0xff] %vm875, %v870
      %936 = vst.msk [vmem:[%s199 + $0x1e0] sm:$0xff] %vm875, %v871
      %937 = vst.msk [vmem:[%s199 + $0x1e8] sm:$0xff] %vm875, %v872
      %938 = vst.msk [vmem:[%s199 + $0x1f0] sm:$0xff] %vm875, %v873
      %939 = vst.msk [vmem:[%s199 + $0x1f8] sm:$0xff] %vm875, %v874
      %s940 = smul.u32 64, %s15
      %p941 = scmp.lt.s32.totalorder %s940, 255
      %s942 = scalar_select %p941, %s940, 255
      %s943 = smul.addr %s942, 8
      %s944 = scalar_lea.vmem %s4, %s943
      // Predicated region
      $region37: #{_fused_mm.1} parent=35 // pred_check
        %p945 = pneg %p122
      $region38: #{_fused_mm.1} parent=35 // pred_check_branch
        %947 = sbr.rel (%p945) target = $region40
      $region39: #{_fused_mm.1} parent=35 // pred_region
        %s948 = smul.u32 64, %s15
      $region40: #{_fused_mm.1} parent=35 // pred_fallthru
        _
    $region36: #{_fused_mm.1} parent=5 // pred_fallthru
      _
    %p949 = scmp.le.s32.totalorder 2, %s10
    // Predicated region
    $region41: #{_fused_mm.1} parent=5 // pred_check
      %p950 = pneg %p949
    $region42: #{_fused_mm.1} parent=5 // pred_check_branch
      %952 = sbr.rel (%p950) target = $region44
    $region43: #{_fused_mm.1} parent=5 // pred_region
      %s953 = ssub.s32 %s10, 2
      // Predicated region
      $region45: #{_fused_mm.1} parent=43 // pred_check
        %p954 = pneg %p128
      $region46: #{_fused_mm.1} parent=43 // pred_check_branch
        %956 = sbr.rel (%p954) target = $region48
      $region47: #{_fused_mm.1} parent=43 // pred_region
        %s957 = smul.u32 64, %s16
        %p958 = scmp.lt.s32.totalorder %s957, 255
        %s959 = scalar_select %p958, %s957, 255
        %s960 = smul.addr %s959, 8
        %s961 = scalar_lea.vmem %s4, %s960
      $region48: #{_fused_mm.1} parent=43 // pred_fallthru
        _
    $region44: #{_fused_mm.1} parent=5 // pred_fallthru
      _
  $region6: #{_fused_mm.1} parent=0 // loop_footer
    %s14 = sadd.s32 1, %s10
  $region7: #{_fused_mm.1} parent=0 // loop_footer_branch
    %9 = sbr.rel target = $region3
  $region8: #{_fused_mm.1} parent=0 // loop_exit
    _

</llo_original>
